<compile_context>
chip_gen: v6e
topology: v6e:2x2x1
jax: 0.10.0
libtpu: 0.0.40
codegen_flags: <defaults>
</compile_context>

<pallas_src>
import functools

import jax
import jax.numpy as jnp
from jax.experimental import pallas as pl
from jax.experimental.pallas import tpu as pltpu


# ----------------------------- linear (tiled) -------------------------------

def _linear_kernel(x_ref, w_ref, b_ref, o_ref, acc_ref):
    # x: (tm, tk), w: (tp, tk) [torch weight layout], b: (1, tp)
    # o = x @ w.T + b, bf16 MXU operands, f32 accumulation.
    kk = pl.program_id(2)

    @pl.when(kk == 0)
    def _():
        acc_ref[...] = jnp.zeros_like(acc_ref)

    acc_ref[...] += jax.lax.dot_general(
        x_ref[...].astype(jnp.bfloat16), w_ref[...].astype(jnp.bfloat16),
        dimension_numbers=(((1,), (1,)), ((), ())),
        preferred_element_type=jnp.float32)

    @pl.when(kk == pl.num_programs(2) - 1)
    def _():
        o_ref[...] = (acc_ref[...] + b_ref[...].astype(jnp.float32)
                      ).astype(o_ref.dtype)


def pallas_linear(x2d, weight, bias, *, out_dtype=None, tm=512, tp=256, tk=512):
    """y = x2d @ weight.T + bias  (torch.nn.functional.linear semantics).

    Weight stays in its native (P, K) layout (no transpose through HBM).
    Grid (M-tiles, P-tiles, K-tiles) with K innermost/"arbitrary" and an f32
    VMEM accumulator, so VMEM stays bounded for large K (v7x 64 MiB per-TC).
    Partial M/P edge blocks only touch masked output regions -> correct.
    """
    M, K = x2d.shape
    P, K2 = weight.shape
    assert K == K2
    if out_dtype is None:
        out_dtype = x2d.dtype
    tm = min(tm, M)
    tp = min(tp, P)
    tk = min(tk, K)
    if K % tk != 0:
        # TODO(synk): mask the K tail instead of falling back to full-K blocks.
        tk = K
    grid = (pl.cdiv(M, tm), pl.cdiv(P, tp), K // tk)
    return pl.pallas_call(
        _linear_kernel,
        out_shape=jax.ShapeDtypeStruct((M, P), out_dtype),
        grid=grid,
        in_specs=[
            pl.BlockSpec((tm, tk), lambda i, j, k: (i, k)),
            pl.BlockSpec((tp, tk), lambda i, j, k: (j, k)),
            pl.BlockSpec((1, tp), lambda i, j, k: (0, j)),
        ],
        out_specs=pl.BlockSpec((tm, tp), lambda i, j, k: (i, j)),
        scratch_shapes=[pltpu.VMEM((tm, tp), jnp.float32)],
        compiler_params=pltpu.CompilerParams(
            dimension_semantics=("parallel", "parallel", "arbitrary")),
    )(x2d, weight, bias.reshape(1, P))


# ------------------------- flash attention (KV-tiled) ------------------------

def _flash_attn_kernel(q_ref, k_ref, v_ref, o_ref, m_ref, l_ref, acc_ref, *,
                       num_heads, head_dim):
    # q_ref: (1, tq, inner), k_ref/v_ref: (1, tk, inner)  -- bf16, packed
    # head-major; attention scale already folded into the Q projection.
    ki = pl.program_id(2)

    @pl.when(ki == 0)
    def _():
        m_ref[...] = jnp.full_like(m_ref, -jnp.inf)
        l_ref[...] = jnp.zeros_like(l_ref)
        acc_ref[...] = jnp.zeros_like(acc_ref)

    # Static per-head loop; each head's result goes straight into its slice of
    # the f32 accumulator scratch (no concatenate, low vreg pressure).
    for h in range(num_heads):
        sl = slice(h * head_dim, (h + 1) * head_dim)
        qh = q_ref[0, :, sl].astype(jnp.bfloat16)        # (tq, d)
        kh = k_ref[0, :, sl].astype(jnp.bfloat16)        # (tk, d)
        s = jax.lax.dot_general(                          # (tq, tk) f32 scores
            qh, kh, dimension_numbers=(((1,), (1,)), ((), ())),
            preferred_element_type=jnp.float32)
        # TODO(synk): causal-mask branch unused (module calls mask=False);
        # attention dropout omitted (dropout_p = 0.0).
        m_prev = m_ref[:, h:h + 1]
        m_new = jnp.maximum(m_prev, jnp.max(s, axis=-1, keepdims=True))
        alpha = jnp.exp(m_prev - m_new)
        p = jnp.exp(s - m_new)
        l_ref[:, h:h + 1] = alpha * l_ref[:, h:h + 1] + jnp.sum(
            p, axis=-1, keepdims=True)
        m_ref[:, h:h + 1] = m_new
        vh = v_ref[0, :, sl].astype(jnp.bfloat16)        # (tk, d)
        pv = jax.lax.dot_general(                         # (tq, d) f32
            p.astype(jnp.bfloat16), vh,
            dimension_numbers=(((1,), (0,)), ((), ())),
            preferred_element_type=jnp.float32)
        acc_ref[:, sl] = alpha * acc_ref[:, sl] + pv

    @pl.when(ki == pl.num_programs(2) - 1)
    def _():
        # Exact reciprocal for the final normalization (accuracy), then one
        # lane-dense full-width store of all heads.
        for h in range(num_heads):
            sl = slice(h * head_dim, (h + 1) * head_dim)
            acc_ref[:, sl] = acc_ref[:, sl] * (1.0 / l_ref[:, h:h + 1])
        o_ref[0] = acc_ref[...].astype(o_ref.dtype)


def pallas_flash_attention(qkv, num_heads, *, tq=256, tk=256):
    """qkv: (N, L, 3*inner) packed [q | k | v] (head-major within each third,
    scale pre-folded into q). Returns context (N, L, inner)."""
    N, L, P3 = qkv.shape
    inner = P3 // 3
    assert inner % num_heads == 0
    head_dim = inner // num_heads
    tq = min(tq, L)
    tk = min(tk, L)
    # TODO(synk): mask padded KV rows to support L not divisible by the tiles.
    assert L % tq == 0 and L % tk == 0, "sequence length must divide tiles"
    grid = (N, L // tq, L // tk)
    kern = functools.partial(_flash_attn_kernel, num_heads=num_heads,
                             head_dim=head_dim)
    return pl.pallas_call(
        kern,
        out_shape=jax.ShapeDtypeStruct((N, L, inner), qkv.dtype),
        grid=grid,
        in_specs=[
            # Same packed array passed three times; the last block coordinate
            # selects the q / k / v third (contiguous, lane-aligned DMAs).
            pl.BlockSpec((1, tq, inner), lambda n, qi, ki: (n, qi, 0)),
            pl.BlockSpec((1, tk, inner), lambda n, qi, ki: (n, ki, 1)),
            pl.BlockSpec((1, tk, inner), lambda n, qi, ki: (n, ki, 2)),
        ],
        out_specs=pl.BlockSpec((1, tq, inner), lambda n, qi, ki: (n, qi, 0)),
        scratch_shapes=[
            pltpu.VMEM((tq, num_heads), jnp.float32),   # running max  (per head)
            pltpu.VMEM((tq, num_heads), jnp.float32),   # running denom
            pltpu.VMEM((tq, inner), jnp.float32),       # running numerator
        ],
        compiler_params=pltpu.CompilerParams(
            dimension_semantics=("parallel", "parallel", "arbitrary")),
    )(qkv, qkv, qkv)


# ------------------------------ module wrapper -------------------------------

def multi_head_self_attention(query, qkv_proj, qkv_bias, out_proj, out_bias,
                              num_heads):
    """Forward pass of MultiHeadSelfAttention (mask=False, dropout=0)."""
    L, N, E = query.shape
    inner = qkv_proj.shape[0] // 3
    d = inner // num_heads
    scale = float(d) ** -0.5

    # One-time weight-side prep (weight-sized ops, outside the hot path):
    #  1) reorder interleaved rows (i*3 + c) -> contiguous [q | k | v] thirds
    #     (head-major within each third), matching torch's view(...,3).chunk;
    #  2) fold the 1/sqrt(d) attention scale into the Q third (weight + bias);
    #  3) cast weights to bf16 (MXU-native); biases stay f32 for the add.
    w_qkv = qkv_proj.reshape(inner, 3, E).transpose(1, 0, 2).reshape(3 * inner, E)
    b_qkv = qkv_bias.reshape(inner, 3).T.reshape(3 * inner)
    q_scale = jnp.concatenate([jnp.full((inner,), scale, dtype=w_qkv.dtype),
                               jnp.ones((2 * inner,), dtype=w_qkv.dtype)])
    w_qkv = (w_qkv * q_scale[:, None]).astype(jnp.bfloat16)
    b_qkv = (b_qkv * q_scale).astype(jnp.float32)
    w_out = out_proj.astype(jnp.bfloat16)

    # Batch-major activations so the attention block DMAs are contiguous.
    xq = jnp.transpose(query, (1, 0, 2)).reshape(N * L, E)          # (N*L, E)

    qkv = pallas_linear(xq, w_qkv, b_qkv, out_dtype=jnp.bfloat16)    # (N*L, 3I)
    qkv = qkv.reshape(N, L, 3 * inner)

    ctx = pallas_flash_attention(qkv, num_heads)                     # (N, L, I)

    out = pallas_linear(ctx.reshape(N * L, inner), w_out, out_bias,
                        out_dtype=query.dtype)                       # (N*L, E)
    return jnp.transpose(out.reshape(N, L, E), (1, 0, 2))            # (L, N, E)


# ------------------------------- reference -----------------------------------

def reference(query, qkv_proj, qkv_bias, out_proj, out_bias, num_heads):
    L, N, E = query.shape
    inner = qkv_proj.shape[0] // 3
    d = inner // num_heads
    scale = float(d) ** -0.5
    qkv = query @ qkv_proj.T + qkv_bias
    qkv = qkv.reshape(L, N, inner, 3)
    q, k, v = qkv[..., 0], qkv[..., 1], qkv[..., 2]
    q = q.reshape(L, N * num_heads, d).transpose(1, 0, 2)
    k = k.reshape(L, N * num_heads, d).transpose(1, 0, 2)
    v = v.reshape(L, N * num_heads, d).transpose(1, 0, 2)
    attn = jax.nn.softmax(scale * jnp.einsum('bld,bmd->blm', q, k), axis=-1)
    out = jnp.einsum('blm,bmd->bld', attn, v)
    out = out.transpose(1, 0, 2).reshape(L, N, inner)
    return out @ out_proj.T + out_bias


# ---------------------------------- main --------------------------------------

if __name__ == "__main__":
    # Small config: embed_dim=128, num_heads=4 (head_dim=32), inner_dim=128,
    # seq L=16, batch N=2 — lane-aligned blocks at test scale.
    L, N, E = 16, 2, 128
    num_heads, inner_dim = 4, 128

    key = jax.random.PRNGKey(0)
    kq, kw, kb, ko, kob = jax.random.split(key, 5)
    query = jax.random.normal(kq, (L, N, E), dtype=jnp.float32)
    qkv_proj = 0.05 * jax.random.normal(kw, (3 * inner_dim, E), dtype=jnp.float32)
    qkv_bias = 0.05 * jax.random.normal(kb, (3 * inner_dim,), dtype=jnp.float32)
    out_proj = 0.05 * jax.random.normal(ko, (E, inner_dim), dtype=jnp.float32)
    out_bias = 0.05 * jax.random.normal(kob, (E,), dtype=jnp.float32)

    out = multi_head_self_attention(query, qkv_proj, qkv_bias, out_proj,
                                    out_bias, num_heads)
    out = jax.block_until_ready(out)

    ref = reference(query, qkv_proj, qkv_bias, out_proj, out_bias, num_heads)
    assert out.shape == (L, N, E)
    # Tolerance accounts for bf16 MXU operands / bf16 intermediate activations.
    assert jnp.allclose(out, ref, atol=2e-2, rtol=2e-2), "mismatch vs reference"
    print("KERNEL_OK")
</pallas_src>

<mosaic_0001>
module attributes {stable_mosaic.version = 11 : i64} {
  func.func @_linear_kernel(%arg0: i32, %arg1: i32, %arg2: i32, %arg3: memref<32x128xf32, #tpu.memory_space<vmem>>, %arg4: memref<256x128xbf16, #tpu.memory_space<vmem>>, %arg5: memref<1x256xf32, #tpu.memory_space<vmem>>, %arg6: memref<32x256xbf16, #tpu.memory_space<vmem>>, %arg7: memref<32x256xf32, #tpu.memory_space<vmem>>) attributes {dimension_semantics = [#tpu.dimension_semantics<parallel>, #tpu.dimension_semantics<parallel>, #tpu.dimension_semantics<arbitrary>], iteration_bounds = array<i64: 1, 2, 1>, scalar_prefetch = 0 : i64, scratch_operands = 1 : i64, tpu.core_type = #tpu.core_type<tc>, window_params = [{transform_indices = @transform_0, window_bounds = array<i64: 32, 128>}, {transform_indices = @transform_1, window_bounds = array<i64: 256, 128>}, {transform_indices = @transform_2, window_bounds = array<i64: 1, 256>}, {transform_indices = @transform_3, window_bounds = array<i64: 32, 256>}]} {
    %c0_i32 = arith.constant 0 : i32
    %0 = arith.cmpi eq, %arg2, %c0_i32 : i32
    %1 = arith.extui %0 : i1 to i32
    %c0_i32_0 = arith.constant 0 : i32
    %2 = arith.cmpi ne, %1, %c0_i32_0 : i32
    scf.if %2 {
      %cst_10 = arith.constant 0.000000e+00 : f32
      %13 = vector.broadcast %cst_10 : f32 to vector<32x256xf32>
      %c0_11 = arith.constant 0 : index
      %c0_12 = arith.constant 0 : index
      %14 = vector.load %arg7[%c0_11, %c0_12] : memref<32x256xf32, #tpu.memory_space<vmem>>, vector<32x256xf32>
      tpu.vector_store %arg7[%c0_11, %c0_12], %13 {strides = array<i32>} : memref<32x256xf32, #tpu.memory_space<vmem>>, vector<32x256xf32>,
    } else {
    }
    %c0 = arith.constant 0 : index
    %c0_1 = arith.constant 0 : index
    %3 = vector.load %arg7[%c0, %c0_1] : memref<32x256xf32, #tpu.memory_space<vmem>>, vector<32x256xf32>
    %c0_2 = arith.constant 0 : index
    %c0_3 = arith.constant 0 : index
    %4 = vector.load %arg3[%c0_2, %c0_3] : memref<32x128xf32, #tpu.memory_space<vmem>>, vector<32x128xf32>
    %5 = arith.truncf %4 : vector<32x128xf32> to vector<32x128xbf16>
    %c0_4 = arith.constant 0 : index
    %c0_5 = arith.constant 0 : index
    %6 = vector.load %arg4[%c0_4, %c0_5] : memref<256x128xbf16, #tpu.memory_space<vmem>>, vector<256x128xbf16>
    %cst = arith.constant dense<0.000000e+00> : vector<32x256xf32>
    %7 = tpu.matmul %5, %6, %cst {dimension_numbers = #tpu.dot_dimension_numbers<[1], [1], [0], [0], [0, 0, 1, 0], [], []>} : vector<32x128xbf16>, vector<256x128xbf16>, vector<32x256xf32> -> vector<32x256xf32>
    %8 = arith.addf %3, %7 : vector<32x256xf32>
    %c0_6 = arith.constant 0 : index
    %c0_7 = arith.constant 0 : index
    %9 = vector.load %arg7[%c0_6, %c0_7] : memref<32x256xf32, #tpu.memory_space<vmem>>, vector<32x256xf32>
    tpu.vector_store %arg7[%c0_6, %c0_7], %8 {strides = array<i32>} : memref<32x256xf32, #tpu.memory_space<vmem>>, vector<32x256xf32>,
    %c0_i32_8 = arith.constant 0 : i32
    %10 = arith.cmpi eq, %arg2, %c0_i32_8 : i32
    %11 = arith.extui %10 : i1 to i32
    %c0_i32_9 = arith.constant 0 : i32
    %12 = arith.cmpi ne, %11, %c0_i32_9 : i32
    scf.if %12 {
      %c0_10 = arith.constant 0 : index
      %c0_11 = arith.constant 0 : index
      %13 = vector.load %arg7[%c0_10, %c0_11] : memref<32x256xf32, #tpu.memory_space<vmem>>, vector<32x256xf32>
      %c0_12 = arith.constant 0 : index
      %c0_13 = arith.constant 0 : index
      %14 = vector.load %arg5[%c0_12, %c0_13] : memref<1x256xf32, #tpu.memory_space<vmem>>, vector<1x256xf32>
      %15 = vector.broadcast %14 : vector<1x256xf32> to vector<32x256xf32>
      %16 = arith.addf %13, %15 : vector<32x256xf32>
      %17 = arith.truncf %16 : vector<32x256xf32> to vector<32x256xbf16>
      %c0_14 = arith.constant 0 : index
      %c0_15 = arith.constant 0 : index
      %18 = vector.load %arg6[%c0_14, %c0_15] : memref<32x256xbf16, #tpu.memory_space<vmem>>, vector<32x256xbf16>
      tpu.vector_store %arg6[%c0_14, %c0_15], %17 {strides = array<i32>} : memref<32x256xbf16, #tpu.memory_space<vmem>>, vector<32x256xbf16>,
    } else {
    }
    return
  }
  func.func @transform_0(%arg0: i32, %arg1: i32, %arg2: i32) -> (i32, i32) {
    %c0_i32 = arith.constant 0 : i32
    return %arg0, %arg2 : i32, i32
  }
  func.func @transform_1(%arg0: i32, %arg1: i32, %arg2: i32) -> (i32, i32) {
    %c0_i32 = arith.constant 0 : i32
    return %arg1, %arg2 : i32, i32
  }
  func.func @transform_2(%arg0: i32, %arg1: i32, %arg2: i32) -> (i32, i32) {
    %c0_i32 = arith.constant 0 : i32
    %c0_i32_0 = arith.constant 0 : i32
    return %c0_i32, %arg1 : i32, i32
  }
  func.func @transform_3(%arg0: i32, %arg1: i32, %arg2: i32) -> (i32, i32) {
    %c0_i32 = arith.constant 0 : i32
    return %arg0, %arg1 : i32, i32
  }
}

</mosaic_0001>

<llo_original>
// kernel: tpu_custom_call.1
$region0: #{tpu_custom_call.1}
  #allocation0 [shape = 'u32[]', space=smem, size = 0x4, offset = 0x4, fixed_abs, tag = 'smem constant byte address 0x4 - core index']
  #allocation1 [shape = 'u32[144,128]{1,0:T(1,128)}', space=vmem, size = 0x12000, scoped, tag = 'internal scratch']
  #allocation2 [shape = 'f32[32,256]{1,0:T(8,128)}', space=vmem, size = 0x8000, scoped, tag = 'scratch operand']
  %s0 = inlined_call_operand.hbm [shape: f32[32,128], index: 0, kind: input, shape index: {}]
  %s1 = inlined_call_operand.hbm [shape: bf16[384,128], index: 1, kind: input, shape index: {}]
  %s2 = inlined_call_operand.vmem [shape: f32[1,384], index: 2, kind: input, shape index: {}]
  %s3 = inlined_call_operand.hbm [shape: bf16[32,384], index: 3, kind: output, shape index: {}]
  %s4 = sld [smem:[#allocation0]]
  $region61: #{tpu_custom_call.1} parent=0
    _
  %s6 = ssub.s32 1, %s4
  %s7 = scalar_select 0, %s6, %s4
  $region1: #{tpu_custom_call.1} parent=0
    #allocation3 [shape = 'u8[16384]{0}', space=vmem, size = 0x4000, scoped, tag = 'input window, operand 0, single buffered']
    #allocation4 [shape = 's32[2]{0}', space=sflag, size = 0x8, scoped, tag = 'scoped memory for tpu_custom_call.1']
    #allocation5 [shape = 's32[2]{0}', space=sflag, size = 0x8, scoped, tag = 'scoped memory for tpu_custom_call.1']
    #allocation6 [shape = 'u8[131072]{0}', space=vmem, size = 0x20000, scoped, tag = 'input window, operand 1']
    #allocation7 [shape = 's32[2]{0}', space=sflag, size = 0x8, scoped, tag = 'scoped memory for tpu_custom_call.1']
    #allocation8 [shape = 'u8[32768]{0}', space=vmem, size = 0x8000, scoped, tag = 'output window, operand 0']
    %8 = vsyncpa [#allocation4], 0
    %9 = vsyncpa [#allocation7], 0
    %s10 = scalar_lea.sflag [#allocation7], 1
    %11 = vsyncpa %s10, 0
    %12 = vsyncpa [#allocation5], 0
    %s13 = scalar_lea.sflag [#allocation5], 1
    %14 = vsyncpa %s13, 0
    loop: start=0, step=1, limit=4
    $region2: #{tpu_custom_call.1} parent=1 // loop_pre_header
      _
    $region3: #{tpu_custom_call.1} parent=1 // loop_header
      %s16 = sphi 0, %s20
      %p17 = scmp.ge.s32.totalorder %s16, 4
      %s23 = sphi 0, %s42
      %s24 = sphi 0, %s38
      %s25 = sphi 0, %s34
      %s26 = sphi 0, %s23
      %s27 = sphi 0, %s24
      %s28 = sphi 0, %s25
      %s29 = sphi 0, %s26
      %s30 = sphi 0, %s27
      %s31 = sphi 0, %s28
      %s47 = sphi 0, %s49
      %s50 = sphi 0, %s47
      %s51 = sphi 0, %s50
      %s67 = sphi 0, %s51
      %s75 = sphi 0, %s77
      %s78 = sphi 0, %s75
      %s79 = sphi 0, %s78
      %s95 = sphi 0, %s79
      %s101 = sphi 0, %s103
      %s104 = sphi 0, %s101
      %s105 = sphi 0, %s104
      %s121 = sphi 0, %s105
      %s129 = sphi 0, %s131
      %s132 = sphi 0, %s129
      %s133 = sphi 0, %s132
      %s149 = sphi 0, %s133
    $region4: #{tpu_custom_call.1} parent=1 // loop_header_branch
      %19 = sbr.rel (%p17) target = $region8
    $region5: #{tpu_custom_call.1} parent=1 // loop_body
      %s21 = ssub.s32 %s16, 1
      %s22 = ssub.s32 %s16, 2
      %s32 = sadd.s32 1, %s25
      %p33 = scmp.ge.s32.totalorder %s32, 1
      %s34 = scalar_select %p33, 0, %s32
      %s35 = sadd.s32 1, %s24
      %s36 = scalar_select %p33, %s35, %s24
      %p37 = scmp.ge.s32.totalorder %s36, 2
      %s38 = scalar_select %p37, 0, %s36
      %s39 = sadd.s32 1, %s23
      %s40 = scalar_select %p37, %s39, %s23
      %p41 = scmp.ge.s32.totalorder %s40, 1
      %s42 = scalar_select %p41, 0, %s40
      %s43 = ssub.s32 %s23, %s42
      %s44 = ssub.s32 %s25, %s34
      %s45 = sor.u32 %s43, %s44
      %p46 = scmp.eq.s32.totalorder %s45, 0
      %s48 = sadd.s32 %s47, 1
      %s49 = scalar_select %p46, %s47, %s48
      %p52 = pneg %p46
      %p53 = scmp.eq.s32.totalorder %s16, 1
      %p54 = por %p52, %p53
      %p55 = scmp.ne.s32.totalorder %s47, %s50
      %p56 = scmp.eq.s32.totalorder %s16, 0
      %p57 = por %p55, %p56
      %p58 = scmp.ne.s32.totalorder %s47, %s50
      %p59 = scmp.eq.s32.totalorder %s21, 1
      %p60 = por %p58, %p59
      %p61 = scmp.ne.s32.totalorder %s50, %s51
      %p62 = scmp.eq.s32.totalorder %s21, 0
      %p63 = por %p61, %p62
      %p64 = scmp.ne.s32.totalorder %s50, %s51
      %p65 = scmp.eq.s32.totalorder %s22, 1
      %p66 = por %p64, %p65
      %p68 = scmp.ne.s32.totalorder %s51, %s67
      %p69 = scmp.eq.s32.totalorder %s22, 0
      %p70 = por %p68, %p69
      %s71 = ssub.s32 %s24, %s38
      %s72 = ssub.s32 %s25, %s34
      %s73 = sor.u32 %s71, %s72
      %p74 = scmp.eq.s32.totalorder %s73, 0
      %s76 = sadd.s32 %s75, 1
      %s77 = scalar_select %p74, %s75, %s76
      %p80 = pneg %p74
      %p81 = scmp.eq.s32.totalorder %s16, 1
      %p82 = por %p80, %p81
      %p83 = scmp.ne.s32.totalorder %s75, %s78
      %p84 = scmp.eq.s32.totalorder %s16, 0
      %p85 = por %p83, %p84
      %p86 = scmp.ne.s32.totalorder %s75, %s78
      %p87 = scmp.eq.s32.totalorder %s21, 1
      %p88 = por %p86, %p87
      %p89 = scmp.ne.s32.totalorder %s78, %s79
      %p90 = scmp.eq.s32.totalorder %s21, 0
      %p91 = por %p89, %p90
      %p92 = scmp.ne.s32.totalorder %s78, %s79
      %p93 = scmp.eq.s32.totalorder %s22, 1
      %p94 = por %p92, %p93
      %p96 = scmp.ne.s32.totalorder %s79, %s95
      %p97 = scmp.eq.s32.totalorder %s22, 0
      %p98 = por %p96, %p97
      %s99 = ssub.s32 %s24, %s38
      %p100 = scmp.eq.s32.totalorder %s99, 0
      %s102 = sadd.s32 %s101, 1
      %s103 = scalar_select %p100, %s101, %s102
      %p106 = pneg %p100
      %p107 = scmp.eq.s32.totalorder %s16, 1
      %p108 = por %p106, %p107
      %p109 = scmp.ne.s32.totalorder %s101, %s104
      %p110 = scmp.eq.s32.totalorder %s16, 0
      %p111 = por %p109, %p110
      %p112 = scmp.ne.s32.totalorder %s101, %s104
      %p113 = scmp.eq.s32.totalorder %s21, 1
      %p114 = por %p112, %p113
      %p115 = scmp.ne.s32.totalorder %s104, %s105
      %p116 = scmp.eq.s32.totalorder %s21, 0
      %p117 = por %p115, %p116
      %p118 = scmp.ne.s32.totalorder %s104, %s105
      %p119 = scmp.eq.s32.totalorder %s22, 1
      %p120 = por %p118, %p119
      %p122 = scmp.ne.s32.totalorder %s105, %s121
      %p123 = scmp.eq.s32.totalorder %s22, 0
      %p124 = por %p122, %p123
      %s125 = ssub.s32 %s23, %s42
      %s126 = ssub.s32 %s24, %s38
      %s127 = sor.u32 %s125, %s126
      %p128 = scmp.eq.s32.totalorder %s127, 0
      %s130 = sadd.s32 %s129, 1
      %s131 = scalar_select %p128, %s129, %s130
      %p134 = pneg %p128
      %p135 = scmp.eq.s32.totalorder %s16, 1
      %p136 = por %p134, %p135
      %p137 = scmp.ne.s32.totalorder %s129, %s132
      %p138 = scmp.eq.s32.totalorder %s16, 0
      %p139 = por %p137, %p138
      %p140 = scmp.ne.s32.totalorder %s129, %s132
      %p141 = scmp.eq.s32.totalorder %s21, 1
      %p142 = por %p140, %p141
      %p143 = scmp.ne.s32.totalorder %s132, %s133
      %p144 = scmp.eq.s32.totalorder %s21, 0
      %p145 = por %p143, %p144
      %p146 = scmp.ne.s32.totalorder %s132, %s133
      %p147 = scmp.eq.s32.totalorder %s22, 1
      %p148 = por %p146, %p147
      %p150 = scmp.ne.s32.totalorder %s133, %s149
      %p151 = scmp.eq.s32.totalorder %s22, 0
      %p152 = por %p150, %p151
      %p153 = scmp.le.s32.totalorder 1, %s16
      %p154 = scmp.lt.s32.totalorder %s16, 3
      %p155 = pnand %p153, %p154
      %p156 = pneg %p155
      // Predicated region
      $region9: #{tpu_custom_call.1} parent=5 // pred_check
        _
      $region10: #{tpu_custom_call.1} parent=5 // pred_check_branch
        %158 = sbr.rel (%p155) target = $region12
      $region11: #{tpu_custom_call.1} parent=5 // pred_region
        %s159 = ssub.s32 %s16, 1
        // Predicated region
        $region13: #{tpu_custom_call.1} parent=11 // pred_check
          %p160 = pneg %p63
        $region14: #{tpu_custom_call.1} parent=11 // pred_check_branch
          %162 = sbr.rel (%p160) target = $region16
        $region15: #{tpu_custom_call.1} parent=11 // pred_region
          %s163 = smul.u32 4, %s26
          %s165 = ssub.s32 512, 512
          %166 = vsyncadd [#allocation4], %s165
          %s167 = sadd.s32 %s28, %s163
          %s168 = smul.addr %s167, 128
          %s169 = scalar_lea.hbm %s0, %s168
          %s170 = sshll.u32 [#allocation3], 4
          %s171 = int_to_ptr.vmem [resolvable:$true] %s170
          %176 = dma.hbm_to_vmem [thread:$0]  %s169, 512, %s171, [#allocation4], 128, 128, 8
        $region16: #{tpu_custom_call.1} parent=11 // pred_fallthru
          _
      $region12: #{tpu_custom_call.1} parent=5 // pred_fallthru
        _
      %p177 = scmp.lt.s32.totalorder %s16, 2
      // Predicated region
      $region17: #{tpu_custom_call.1} parent=5 // pred_check
        %p178 = pneg %p177
      $region18: #{tpu_custom_call.1} parent=5 // pred_check_branch
        %180 = sbr.rel (%p178) target = $region20
      $region19: #{tpu_custom_call.1} parent=5 // pred_region
        // Predicated region
        $region21: #{tpu_custom_call.1} parent=19 // pred_check
          %p181 = pneg %p85
        $region22: #{tpu_custom_call.1} parent=19 // pred_check_branch
          %183 = sbr.rel (%p181) target = $region24
        $region23: #{tpu_custom_call.1} parent=19 // pred_region
          %s184 = sand.u32 %s75, 1
          %s185 = scalar_lea.sflag [#allocation7], %s184
          %s186 = sand.u32 %s75, 1
          %s187 = smul.addr %s186, 128
          %s188 = scalar_lea.vmem [#allocation6], %s187
          %s189 = smul.u32 32, %s24
          %s190 = ssub.s32 48, %s189
          %p191 = scmp.lt.s32.totalorder %s190, 32
          %s192 = scalar_select %p191, %s190, 32
          %s193 = smul.u32 64, %s192
          %s195 = ssub.s32 2048, %s193
          %196 = vsyncadd %s185, %s195
          %p197 = scmp.ne.s32.totalorder 0, %s193
          %s198 = sadd.s32 %s25, %s189
          %s199 = smul.addr %s198, 64
          %s200 = scalar_lea.hbm %s1, %s199
          %s201 = smul.u32 4, %s192
          %s202 = sshll.u32 %s188, 4
          %s203 = int_to_ptr.vmem [resolvable:$true] %s202
          %s204 = sshll.u32 %s201, 4
          %208 = dma.hbm_to_vmem [thread:$0]  (%p197), %s200, %s204, %s203, %s185, 64, 64, 4
        $region24: #{tpu_custom_call.1} parent=19 // pred_fallthru
          _
        // Predicated region
        $region25: #{tpu_custom_call.1} parent=19 // pred_check
          %p209 = pneg %p111
        $region26: #{tpu_custom_call.1} parent=19 // pred_check_branch
          %211 = sbr.rel (%p209) target = $region28
        $region27: #{tpu_custom_call.1} parent=19 // pred_region
          %s212 = smul.u32 2, %s24
          %s213 = ssub.s32 3, %s212
          %p214 = scmp.lt.s32.totalorder %s213, 2
          %s215 = scalar_select %p214, %s213, 2
          %s216 = smul.u32 16, %s215
          %p217 = scmp.lt.s32.totalorder %s212, 2
          %s218 = scalar_select %p217, %s212, 2
          %s219 = scalar_lea.vmem %s2, %s218
          %s220 = smul.u32 2, %s24
          %s221 = ssub.s32 3, %s220
          %p222 = scmp.lt.s32.totalorder %s221, 2
          %s223 = scalar_select %p222, %s221, 2
          %s224 = smul.u32 16, %s223
        $region28: #{tpu_custom_call.1} parent=19 // pred_fallthru
          _
      $region20: #{tpu_custom_call.1} parent=5 // pred_fallthru
        _
      %p225 = scmp.le.s32.totalorder 1, %s16
      %p226 = scmp.lt.s32.totalorder %s16, 3
      %p227 = pnand %p225, %p226
      %p228 = pneg %p227
      // Predicated region
      $region29: #{tpu_custom_call.1} parent=5 // pred_check
        _
      $region30: #{tpu_custom_call.1} parent=5 // pred_check_branch
        %230 = sbr.rel (%p227) target = $region32
      $region31: #{tpu_custom_call.1} parent=5 // pred_region
        %s231 = ssub.s32 %s16, 1
        // Predicated region
        $region33: #{tpu_custom_call.1} parent=31 // pred_check
          %p232 = pneg %p63
        $region34: #{tpu_custom_call.1} parent=31 // pred_check_branch
          %234 = sbr.rel (%p232) target = $region36
        $region35: #{tpu_custom_call.1} parent=31 // pred_region
          %235 = dma.done [#allocation4], 512
        $region36: #{tpu_custom_call.1} parent=31 // pred_fallthru
          _
        %s236 = sand.u32 %s78, 1
        %s237 = scalar_lea.sflag [#allocation7], %s236
        %s238 = sand.u32 %s78, 1
        %s239 = smul.addr %s238, 128
        %s240 = scalar_lea.vmem [#allocation6], %s239
        // Predicated region
        $region37: #{tpu_custom_call.1} parent=31 // pred_check
          %p241 = pneg %p91
        $region38: #{tpu_custom_call.1} parent=31 // pred_check_branch
          %243 = sbr.rel (%p241) target = $region40
        $region39: #{tpu_custom_call.1} parent=31 // pred_region
          %244 = dma.done %s237, 2048
        $region40: #{tpu_custom_call.1} parent=31 // pred_fallthru
          _
        %p245 = pneg %p63
        %p246 = pneg %p60
        %s247 = sand.u32 %s78, 1
        %s248 = scalar_lea.sflag [#allocation7], %s247
        %s249 = sand.u32 %s78, 1
        %s250 = smul.addr %s249, 128
        %s251 = scalar_lea.vmem [#allocation6], %s250
        %p252 = pneg %p91
        %p253 = pneg %p88
        %s254 = smul.u32 2, %s27
        %s255 = ssub.s32 3, %s254
        %p256 = scmp.lt.s32.totalorder %s255, 2
        %s257 = scalar_select %p256, %s255, 2
        %s258 = smul.u32 16, %s257
        %p259 = scmp.lt.s32.totalorder %s254, 2
        %s260 = scalar_select %p259, %s254, 2
        %s261 = scalar_lea.vmem %s2, %s260
        %p262 = pneg %p117
        %p263 = pneg %p114
        %p264 = pneg %p145
        %p265 = pneg %p142
        %s266 = sand.u32 %s132, 1
        %s267 = scalar_lea.sflag [#allocation5], %s266
        %s268 = sand.u32 %s132, 1
        %s269 = smul.addr %s268, 32
        %s270 = scalar_lea.vmem [#allocation8], %s269
        %s271 = smul.u32 4, %s26
        %s272 = smul.u32 32, %s27
        %s273 = ssub.s32 48, %s272
        %p274 = scmp.lt.s32.totalorder %s273, 32
        %s275 = scalar_select %p274, %s273, 32
        %s276 = smul.u32 64, %s275
        %s277 = smul.u32 2, %s27
        %s278 = ssub.s32 3, %s277
        %p279 = scmp.lt.s32.totalorder %s278, 2
        %s280 = scalar_select %p279, %s278, 2
        %s281 = smul.u32 16, %s280
        %p282 = scmp.lt.s32.totalorder %s277, 2
        %s283 = scalar_select %p282, %s277, 2
        %s284 = scalar_lea.vmem %s2, %s283
        %s285 = smul.u32 2, %s27
        %s286 = ssub.s32 3, %s285
        %p287 = scmp.lt.s32.totalorder %s286, 2
        %s288 = scalar_select %p287, %s286, 2
        %s289 = smul.u32 16, %s288
        %s290 = smul.u32 4, %s26
        %s291 = smul.u32 2, %s27
        %s292 = ssub.s32 3, %s291
        %p293 = scmp.lt.s32.totalorder %s292, 2
        %s294 = scalar_select %p293, %s292, 2
        %s295 = smul.u32 256, %s294
        %p297 = scmp.eq.s32.totalorder %s28, 0
        // Predicated region
        $region41: #{tpu_custom_call.1} parent=31 // pred_check
          %p298 = pneg %p297
        $region42: #{tpu_custom_call.1} parent=31 // pred_check_branch
          %300 = sbr.rel (%p298) target = $region44
        $region43: #{tpu_custom_call.1} parent=31 // pred_region
          %301 = vst [vmem:[#allocation2] sm:$0xff] 0.0
          %302 = vst [vmem:[#allocation2 + $0x8] sm:$0xff] 0.0
          %303 = vst [vmem:[#allocation2 + $0x10] sm:$0xff] 0.0
          %304 = vst [vmem:[#allocation2 + $0x18] sm:$0xff] 0.0
          %305 = vst [vmem:[#allocation2 + $0x20] sm:$0xff] 0.0
          %306 = vst [vmem:[#allocation2 + $0x28] sm:$0xff] 0.0
          %307 = vst [vmem:[#allocation2 + $0x30] sm:$0xff] 0.0
          %308 = vst [vmem:[#allocation2 + $0x38] sm:$0xff] 0.0
        $region44: #{tpu_custom_call.1} parent=31 // pred_fallthru
          _
        %v309 = vld [vmem:[#allocation2] sm:$0xff]
        %v310 = vld [vmem:[#allocation2 + $0x8] sm:$0xff]
        %v311 = vld [vmem:[#allocation2 + $0x10] sm:$0xff]
        %v312 = vld [vmem:[#allocation2 + $0x18] sm:$0xff]
        %v313 = vld [vmem:[#allocation2 + $0x20] sm:$0xff]
        %v314 = vld [vmem:[#allocation2 + $0x28] sm:$0xff]
        %v315 = vld [vmem:[#allocation2 + $0x30] sm:$0xff]
        %v316 = vld [vmem:[#allocation2 + $0x38] sm:$0xff]
        %v317 = vld [vmem:[#allocation3] sm:$0xff]
        %v318 = vld [vmem:[#allocation3 + $0x8] sm:$0xff]
        %v319 = vld [vmem:[#allocation3 + $0x10] sm:$0xff]
        %v320 = vld [vmem:[#allocation3 + $0x18] sm:$0xff]
        %v321 = vpack.c.bf16 %v318, %v317
        %v322 = vpack.c.bf16 %v320, %v319
        %v323 = vld [vmem:[%s240] sm:$0xf]
        %v324 = vld [vmem:[%s240 + $0x4] sm:$0xf]
        %v325 = vld [vmem:[%s240 + $0x8] sm:$0xf]
        %v326 = vld [vmem:[%s240 + $0xc] sm:$0xf]
        %v327 = vld [vmem:[%s240 + $0x10] sm:$0xf]
        %v328 = vld [vmem:[%s240 + $0x14] sm:$0xf]
        %v329 = vld [vmem:[%s240 + $0x18] sm:$0xf]
        %v330 = vld [vmem:[%s240 + $0x1c] sm:$0xf]
        %v331 = vld [vmem:[%s240 + $0x20] sm:$0xf]
        %v332 = vld [vmem:[%s240 + $0x24] sm:$0xf]
        %v333 = vld [vmem:[%s240 + $0x28] sm:$0xf]
        %v334 = vld [vmem:[%s240 + $0x2c] sm:$0xf]
        %v335 = vld [vmem:[%s240 + $0x30] sm:$0xf]
        %v336 = vld [vmem:[%s240 + $0x34] sm:$0xf]
        %v337 = vld [vmem:[%s240 + $0x38] sm:$0xf]
        %v338 = vld [vmem:[%s240 + $0x3c] sm:$0xf]
        %v339 = vld [vmem:[%s240 + $0x40] sm:$0xf]
        %v340 = vld [vmem:[%s240 + $0x44] sm:$0xf]
        %v341 = vld [vmem:[%s240 + $0x48] sm:$0xf]
        %v342 = vld [vmem:[%s240 + $0x4c] sm:$0xf]
        %v343 = vld [vmem:[%s240 + $0x50] sm:$0xf]
        %v344 = vld [vmem:[%s240 + $0x54] sm:$0xf]
        %v345 = vld [vmem:[%s240 + $0x58] sm:$0xf]
        %v346 = vld [vmem:[%s240 + $0x5c] sm:$0xf]
        %v347 = vld [vmem:[%s240 + $0x60] sm:$0xf]
        %v348 = vld [vmem:[%s240 + $0x64] sm:$0xf]
        %v349 = vld [vmem:[%s240 + $0x68] sm:$0xf]
        %v350 = vld [vmem:[%s240 + $0x6c] sm:$0xf]
        %v351 = vld [vmem:[%s240 + $0x70] sm:$0xf]
        %v352 = vld [vmem:[%s240 + $0x74] sm:$0xf]
        %v353 = vld [vmem:[%s240 + $0x78] sm:$0xf]
        %v354 = vld [vmem:[%s240 + $0x7c] sm:$0xf]
        %v387 = vunpack.c.l.b16 %v323
        %v388 = vunpack.c.l.b16 %v324
        %v389 = vunpack.c.l.b16 %v325
        %v390 = vunpack.c.l.b16 %v326
        %v391 = vunpack.c.l.b16 %v327
        %v392 = vunpack.c.l.b16 %v328
        %v393 = vunpack.c.l.b16 %v329
        %v394 = vunpack.c.l.b16 %v330
        %v395 = vunpack.c.l.b16 %v331
        %v396 = vunpack.c.l.b16 %v332
        %v397 = vunpack.c.l.b16 %v333
        %v398 = vunpack.c.l.b16 %v334
        %v399 = vunpack.c.l.b16 %v335
        %v400 = vunpack.c.l.b16 %v336
        %v401 = vunpack.c.l.b16 %v337
        %v402 = vunpack.c.l.b16 %v338
        %v403 = vunpack.c.l.b16 %v339
        %v404 = vunpack.c.l.b16 %v340
        %v405 = vunpack.c.l.b16 %v341
        %v406 = vunpack.c.l.b16 %v342
        %v407 = vunpack.c.l.b16 %v343
        %v408 = vunpack.c.l.b16 %v344
        %v409 = vunpack.c.l.b16 %v345
        %v410 = vunpack.c.l.b16 %v346
        %v411 = vunpack.c.l.b16 %v347
        %v412 = vunpack.c.l.b16 %v348
        %v413 = vunpack.c.l.b16 %v349
        %v414 = vunpack.c.l.b16 %v350
        %v415 = vunpack.c.l.b16 %v351
        %v416 = vunpack.c.l.b16 %v352
        %v417 = vunpack.c.l.b16 %v353
        %v418 = vunpack.c.l.b16 %v354
        %v419 = vpack.c.b16 %v388, %v387
        %v420 = vpack.c.b16 %v390, %v389
        %v421 = vpack.c.b16 %v392, %v391
        %v422 = vpack.c.b16 %v394, %v393
        %v423 = vpack.c.b16 %v396, %v395
        %v424 = vpack.c.b16 %v398, %v397
        %v425 = vpack.c.b16 %v400, %v399
        %v426 = vpack.c.b16 %v402, %v401
        %v427 = vpack.c.b16 %v404, %v403
        %v428 = vpack.c.b16 %v406, %v405
        %v429 = vpack.c.b16 %v408, %v407
        %v430 = vpack.c.b16 %v410, %v409
        %v431 = vpack.c.b16 %v412, %v411
        %v432 = vpack.c.b16 %v414, %v413
        %v433 = vpack.c.b16 %v416, %v415
        %v434 = vpack.c.b16 %v418, %v417
        %451 = vmatprep.subr.bf16.mxu0 0
        %452 = vmatpush1.bf16.xpose.msra.mxu0 %v426
        %453 = vmatprep.subr.bf16.mxu0 0
        %454 = vmatpush1.bf16.xpose.msra.mxu0 %v425
        %455 = vmatprep.subr.bf16.mxu0 0
        %456 = vmatpush1.bf16.xpose.msra.mxu0 %v424
        %457 = vmatprep.subr.bf16.mxu0 0
        %458 = vmatpush1.bf16.xpose.msra.mxu0 %v423
        %459 = vmatprep.subr.bf16.mxu0 0
        %460 = vmatpush1.bf16.xpose.msra.mxu0 %v422
        %461 = vmatprep.subr.bf16.mxu0 0
        %462 = vmatpush1.bf16.xpose.msra.mxu0 %v421
        %463 = vmatprep.subr.bf16.mxu0 0
        %464 = vmatpush1.bf16.xpose.msra.mxu0 %v420
        %465 = vmatprep.subr.bf16.mxu0 0
        %466 = vmatpush1.bf16.xpose.msra.mxu0 %v419
        %467 = vmatprep.subr.bf16.mxu0 0
        %468 = vmatpush2.bf16.xpose.msra.mxu0 %v434
        %469 = vmatprep.subr.bf16.mxu0 0
        %470 = vmatpush2.bf16.xpose.msra.mxu0 %v433
        %471 = vmatprep.subr.bf16.mxu0 0
        %472 = vmatpush2.bf16.xpose.msra.mxu0 %v432
        %473 = vmatprep.subr.bf16.mxu0 0
        %474 = vmatpush2.bf16.xpose.msra.mxu0 %v431
        %475 = vmatprep.subr.bf16.mxu0 0
        %476 = vmatpush2.bf16.xpose.msra.mxu0 %v430
        %477 = vmatprep.subr.bf16.mxu0 0
        %478 = vmatpush2.bf16.xpose.msra.mxu0 %v429
        %479 = vmatprep.subr.bf16.mxu0 0
        %480 = vmatpush2.bf16.xpose.msra.mxu0 %v428
        %481 = vmatprep.subr.bf16.mxu0 0
        %482 = vmatpush2.bf16.xpose.msra.mxu0 %v427
        %483 = vmatprep.mubr.bf16.mxu0 0
        %484 = vmatmul.mubr.bf16.gmra.mxu0 %v321
        %v485 = vpop.f32.mrf.mxu0
        %v486 = vadd.f32 0.0, %v485
        %v487 = vpop.f32.mrf.mxu0
        %v488 = vadd.f32 0.0, %v487
        %v489 = vpop.f32.mrf.mxu0
        %v490 = vadd.f32 0.0, %v489
        %v491 = vpop.f32.mrf.mxu0
        %v492 = vadd.f32 0.0, %v491
        %493 = vmatprep.mubr.bf16.mxu0 0
        %494 = vmatmul.mubr.bf16.gmra.mxu0 %v322
        %v495 = vpop.f32.mrf.mxu0
        %v496 = vadd.f32 0.0, %v495
        %v497 = vpop.f32.mrf.mxu0
        %v498 = vadd.f32 0.0, %v497
        %v499 = vpop.f32.mrf.mxu0
        %v500 = vadd.f32 0.0, %v499
        %v501 = vpop.f32.mrf.mxu0
        %v502 = vadd.f32 0.0, %v501
        %503 = vdwg.mxu0
        %v504 = vadd.f32 %v309, %v486
        %v505 = vadd.f32 %v310, %v488
        %v506 = vadd.f32 %v311, %v490
        %v507 = vadd.f32 %v312, %v492
        %v508 = vadd.f32 %v313, %v496
        %v509 = vadd.f32 %v314, %v498
        %v510 = vadd.f32 %v315, %v500
        %v511 = vadd.f32 %v316, %v502
        %512 = vst [vmem:[#allocation2] sm:$0xff] %v504
        %513 = vst [vmem:[#allocation2 + $0x8] sm:$0xff] %v505
        %514 = vst [vmem:[#allocation2 + $0x10] sm:$0xff] %v506
        %515 = vst [vmem:[#allocation2 + $0x18] sm:$0xff] %v507
        %516 = vst [vmem:[#allocation2 + $0x20] sm:$0xff] %v508
        %517 = vst [vmem:[#allocation2 + $0x28] sm:$0xff] %v509
        %518 = vst [vmem:[#allocation2 + $0x30] sm:$0xff] %v510
        %519 = vst [vmem:[#allocation2 + $0x38] sm:$0xff] %v511
        // Predicated region
        $region45: #{tpu_custom_call.1} parent=31 // pred_check
          %p520 = pneg %p297
        $region46: #{tpu_custom_call.1} parent=31 // pred_check_branch
          %522 = sbr.rel (%p520) target = $region48
        $region47: #{tpu_custom_call.1} parent=31 // pred_region
          %v523 = vld [vmem:[#allocation2] sm:$0xff]
          %v524 = vld [vmem:[#allocation2 + $0x8] sm:$0xff]
          %v525 = vld [vmem:[#allocation2 + $0x10] sm:$0xff]
          %v526 = vld [vmem:[#allocation2 + $0x18] sm:$0xff]
          %v527 = vld [vmem:[#allocation2 + $0x20] sm:$0xff]
          %v528 = vld [vmem:[#allocation2 + $0x28] sm:$0xff]
          %v529 = vld [vmem:[#allocation2 + $0x30] sm:$0xff]
          %v530 = vld [vmem:[#allocation2 + $0x38] sm:$0xff]
          %v531 = vld [vmem:[%s284] sm:$0x3]
          %v533 = vlaneseq
          %v534 = vshrl.u32 %v533, 7
          %v535 = vsub.s32 0, %v534
          %v536 = vrot.slane %v531, %v535
          %v537 = vlaneseq
          %v538 = vshrl.u32 %v537, 7
          %v539 = vsub.s32 1, %v538
          %v540 = vrot.slane %v531, %v539
          %v543 = vadd.f32 %v523, %v536
          %v544 = vadd.f32 %v524, %v540
          %v545 = vadd.f32 %v525, %v536
          %v546 = vadd.f32 %v526, %v540
          %v547 = vadd.f32 %v527, %v536
          %v548 = vadd.f32 %v528, %v540
          %v549 = vadd.f32 %v529, %v536
          %v550 = vadd.f32 %v530, %v540
          %v551 = vpack.c.bf16 %v545, %v543
          %v552 = vpack.c.bf16 %v546, %v544
          %v553 = vpack.c.bf16 %v549, %v547
          %v554 = vpack.c.bf16 %v550, %v548
          %v559 = vunpack.c.l.b16 %v551
          %v560 = vunpack.c.l.b16 %v552
          %v561 = vunpack.c.h.b16 %v551
          %v562 = vunpack.c.h.b16 %v552
          %v563 = vunpack.c.l.b16 %v553
          %v564 = vunpack.c.l.b16 %v554
          %v565 = vunpack.c.h.b16 %v553
          %v566 = vunpack.c.h.b16 %v554
          %v567 = vpack.c.b16 %v560, %v559
          %v568 = vpack.c.b16 %v562, %v561
          %v569 = vpack.c.b16 %v564, %v563
          %v570 = vpack.c.b16 %v566, %v565
          %575 = vst [vmem:[%s270] sm:$0xff] %v567
          %576 = vst [vmem:[%s270 + $0x8] sm:$0xff] %v568
          %577 = vst [vmem:[%s270 + $0x10] sm:$0xff] %v569
          %578 = vst [vmem:[%s270 + $0x18] sm:$0xff] %v570
        $region48: #{tpu_custom_call.1} parent=31 // pred_fallthru
          _
        %s579 = sand.u32 %s132, 1
        %s580 = scalar_lea.sflag [#allocation5], %s579
        %s581 = sand.u32 %s132, 1
        %s582 = smul.addr %s581, 32
        %s583 = scalar_lea.vmem [#allocation8], %s582
        // Predicated region
        $region49: #{tpu_custom_call.1} parent=31 // pred_check
          %p584 = pneg %p142
        $region50: #{tpu_custom_call.1} parent=31 // pred_check_branch
          %586 = sbr.rel (%p584) target = $region52
        $region51: #{tpu_custom_call.1} parent=31 // pred_region
          %s587 = smul.u32 4, %s26
          %s588 = smul.u32 2, %s27
          %s589 = ssub.s32 3, %s588
          %p590 = scmp.lt.s32.totalorder %s589, 2
          %s591 = scalar_select %p590, %s589, 2
          %s592 = smul.u32 256, %s591
          %s594 = ssub.s32 512, %s592
          %595 = vsyncadd %s580, %s594
          %p596 = scmp.ne.s32.totalorder 0, %s592
          %s597 = smul.addr %s587, 3
          %s598 = sadd.s32 %s588, %s597
          %s599 = smul.addr %s598, 64
          %s600 = scalar_lea.hbm %s3, %s599
          %s601 = smul.u32 %s591, 4
          %s602 = smul.u32 %s601, 4
          %s603 = sshll.u32 %s583, 4
          %s604 = int_to_ptr.vmem [resolvable:$true] %s603
          %s605 = sshll.u32 %s602, 4
          %609 = dma.vmem_to_hbm [thread:$0]  (%p596), %s604, %s605, %s600, %s580, 128, 192, %s601
        $region52: #{tpu_custom_call.1} parent=31 // pred_fallthru
          _
      $region32: #{tpu_custom_call.1} parent=5 // pred_fallthru
        _
      %p610 = scmp.le.s32.totalorder 2, %s16
      // Predicated region
      $region53: #{tpu_custom_call.1} parent=5 // pred_check
        %p611 = pneg %p610
      $region54: #{tpu_custom_call.1} parent=5 // pred_check_branch
        %613 = sbr.rel (%p611) target = $region56
      $region55: #{tpu_custom_call.1} parent=5 // pred_region
        %s614 = ssub.s32 %s16, 2
        // Predicated region
        $region57: #{tpu_custom_call.1} parent=55 // pred_check
          %p615 = pneg %p148
        $region58: #{tpu_custom_call.1} parent=55 // pred_check_branch
          %617 = sbr.rel (%p615) target = $region60
        $region59: #{tpu_custom_call.1} parent=55 // pred_region
          %s618 = sand.u32 %s133, 1
          %s619 = scalar_lea.sflag [#allocation5], %s618
          %s620 = sand.u32 %s133, 1
          %s621 = smul.addr %s620, 32
          %s622 = scalar_lea.vmem [#allocation8], %s621
          %623 = dma.done %s619, 512
        $region60: #{tpu_custom_call.1} parent=55 // pred_fallthru
          _
      $region56: #{tpu_custom_call.1} parent=5 // pred_fallthru
        _
    $region6: #{tpu_custom_call.1} parent=1 // loop_footer
      %s20 = sadd.s32 1, %s16
    $region7: #{tpu_custom_call.1} parent=1 // loop_footer_branch
      %15 = sbr.rel target = $region3
    $region8: #{tpu_custom_call.1} parent=1 // loop_exit
      _
    %624 = vsyncpa [#allocation4], 1
    %s625 = scalar_lea.sflag [#allocation4], 1
    %626 = vsyncpa %s625, 1
    %627 = vsyncpa [#allocation7], 1
    %s628 = scalar_lea.sflag [#allocation7], 1
    %629 = vsyncpa %s628, 1
    %630 = vsyncpa [#allocation5], 1
    %s631 = scalar_lea.sflag [#allocation5], 1
    %632 = vsyncpa %s631, 1

</llo_original>
